<compile_context>
chip_gen: v6e
topology: v6e:2x2x1
jax: 0.10.0
libtpu: 0.0.40
codegen_flags: <defaults>
</compile_context>

<pallas_src>
import math

import jax
import jax.numpy as jnp
from jax.experimental import pallas as pl
from jax.experimental.pallas import tpu as pltpu


# ---------------------------------------------------------------------------
# Helpers
# ---------------------------------------------------------------------------
def _round_up(x, m):
    return (x + m - 1) // m * m


def _half_tile(t):
    """Halve a tile size while keeping it a positive multiple of 128."""
    return max(128, (t // 2) // 128 * 128)


def _vmem_budget_bytes():
    """VMEM we are willing to request: ~0.8x physical, capped at 100 MiB."""
    cap = 64 * 2**20  # conservative default (v7x-sized)
    try:
        info = pltpu.get_tpu_info()
        cap = int(getattr(info, "vmem_capacity_bytes", cap))
    except Exception:
        pass
    return int(min(100 * 2**20, int(0.8 * cap)))


def _tile_footprint_bytes(tm, th, Dp, isz, osz):
    """Approximate VMEM footprint for one grid step (double-buffered I/O)."""
    return (2 * tm * Dp * isz          # x row tile
            + 2 * Dp * th * isz        # w1 H-block
            + 2 * th * Dp * isz        # w2 H-block
            + 2 * tm * Dp * osz        # output tile
            + tm * Dp * 4              # f32 accumulator scratch
            + 2 * tm * th * 4          # h / gelu f32 intermediates
            + 4 * (th + Dp) * 4)       # biases


# ---------------------------------------------------------------------------
# Kernel
# ---------------------------------------------------------------------------
_GELU_C1 = math.sqrt(2.0 / math.pi)
_GELU_C2 = 0.044715 * _GELU_C1


def mlp_kernel(x_ref, w1_ref, b1_ref, w2_ref, b2_ref, o_ref, acc_ref):
    k = pl.program_id(1)

    @pl.when(k == 0)
    def _init():
        acc_ref[...] = jnp.zeros_like(acc_ref)

    # fc1 partial: (tm, Dp) @ (Dp, th) -> f32, plus this H-block's bias slice.
    h = jnp.dot(x_ref[...], w1_ref[...], preferred_element_type=jnp.float32)
    h = h + b1_ref[...]

    # NewGelu (tanh approximation) in f32; constants pre-folded, h*h*h not pow.
    t = jnp.tanh(_GELU_C1 * h + _GELU_C2 * (h * h * h))
    g = 0.5 * h * (1.0 + t)

    # c_proj partial: (tm, th) @ (th, Dp), accumulated in f32 scratch.
    acc_ref[...] += jnp.dot(g.astype(w2_ref.dtype), w2_ref[...],
                            preferred_element_type=jnp.float32)

    @pl.when(k == pl.num_programs(1) - 1)
    def _store():
        o_ref[...] = (acc_ref[...] + b2_ref[...]).astype(o_ref.dtype)


# ---------------------------------------------------------------------------
# Wrapper: one-time weight prep (hoisted) + per-call pallas_call
# ---------------------------------------------------------------------------
def make_mlp(w1, b1, w2, b2, *, compute_dtype=jnp.bfloat16, out_dtype=None):
    """Build a fused-MLP forward closure.

    w1: (D, 4D), b1: (4D,), w2: (4D, D), b2: (D,) -- stored (in, out) so the
    kernel computes y = gelu(x @ w1 + b1) @ w2 + b2.

    Weight cast/pad happens here, ONCE; the returned `apply(x)` only touches
    the activation. bf16 compute_dtype is an intentional precision tradeoff
    (f32 MXU accumulation, f32 GELU); pass float32 for exact results.
    """
    D, H = w1.shape
    assert w2.shape == (H, D) and b1.shape == (H,) and b2.shape == (D,)

    Dp = _round_up(D, 128)
    isz = jnp.dtype(compute_dtype).itemsize
    budget = _vmem_budget_bytes()
    big_vmem = budget >= 80 * 2**20      # 128-MiB parts (v5e / v6e)

    tm_max = 1024 if big_vmem else 512
    th = 512 if big_vmem else 256
    th = min(th, _round_up(H, 128))
    # Make sure the largest row tile we might use fits the budget; shrink th.
    while th > 128 and _tile_footprint_bytes(tm_max, th, Dp, isz, 4) > budget:
        th = _half_tile(th)
    Hp = _round_up(H, th)

    # ---- one-time weight / bias cast + pad (skipped when already aligned) --
    # Zero padding is exact: padded D rows of w1 multiply padded (zero) x
    # cols; padded H cols of w1/b1 give gelu(0)=0 so contribute nothing;
    # padded D cols of w2/b2 are sliced off after the kernel.
    if (Dp, Hp) == (D, H):
        w1p = w1.astype(compute_dtype)
        w2p = w2.astype(compute_dtype)
    else:
        w1p = jnp.zeros((Dp, Hp), compute_dtype).at[:D, :H].set(
            w1.astype(compute_dtype))
        w2p = jnp.zeros((Hp, Dp), compute_dtype).at[:H, :D].set(
            w2.astype(compute_dtype))
    b1p = jnp.zeros((1, Hp), jnp.float32).at[0, :H].set(b1.astype(jnp.float32))
    b2p = jnp.zeros((1, Dp), jnp.float32).at[0, :D].set(b2.astype(jnp.float32))

    def apply(x):
        B, T, D_ = x.shape
        assert D_ == D
        M = B * T
        odt = out_dtype if out_dtype is not None else x.dtype
        osz = jnp.dtype(odt).itemsize

        # Row tile: as large as VMEM allows, but keep >= 2 parallel row tiles
        # when M is big enough (dual-TensorCore chips), multiples of 128.
        tm = min(tm_max, _round_up(M, 128))
        while M >= 512 and _round_up(M, tm) // tm < 2 and tm > 256:
            tm = _half_tile(tm)
        while tm > 128 and _tile_footprint_bytes(tm, th, Dp, isz, osz) > budget:
            tm = _half_tile(tm)

        Mp = _round_up(M, tm)
        xm = x.reshape(M, D).astype(compute_dtype)
        if (Mp, Dp) == (M, D):
            x2 = xm
        else:
            x2 = jnp.zeros((Mp, Dp), compute_dtype).at[:M, :D].set(xm)

        grid = (Mp // tm, Hp // th)
        footprint = _tile_footprint_bytes(tm, th, Dp, isz, osz)
        vmem_limit = int(min(budget, max(16 * 2**20, int(1.5 * footprint))))

        out2 = pl.pallas_call(
            mlp_kernel,
            out_shape=jax.ShapeDtypeStruct((Mp, Dp), odt),
            grid_spec=pltpu.PrefetchScalarGridSpec(
                num_scalar_prefetch=0,
                grid=grid,
                in_specs=[
                    pl.BlockSpec((tm, Dp), lambda i, k: (i, 0)),   # x row tile
                    pl.BlockSpec((Dp, th), lambda i, k: (0, k)),   # w1 H-block
                    pl.BlockSpec((1, th), lambda i, k: (0, k)),    # b1 H-block
                    pl.BlockSpec((th, Dp), lambda i, k: (k, 0)),   # w2 H-block
                    pl.BlockSpec((1, Dp), lambda i, k: (0, 0)),    # b2
                ],
                out_specs=pl.BlockSpec((tm, Dp), lambda i, k: (i, 0)),
                scratch_shapes=[pltpu.VMEM((tm, Dp), jnp.float32)],
            ),
            compiler_params=pltpu.CompilerParams(
                dimension_semantics=("parallel", "arbitrary"),
                vmem_limit_bytes=vmem_limit),
        )(x2, w1p, b1p, w2p, b2p)

        out = out2 if (Mp, Dp) == (M, D) else out2[:M, :D]
        return out.reshape(B, T, D)

    return apply


def mlp_reference(x, w1, b1, w2, b2):
    h = x @ w1 + b1
    c = math.sqrt(2.0 / math.pi)
    g = 0.5 * h * (1.0 + jnp.tanh(c * (h + 0.044715 * (h * h * h))))
    return g @ w2 + b2


if __name__ == "__main__":
    # Small config matching the module: batch=2, seq=8, d_model=32 -> hidden=128
    B, T, D = 2, 8, 32
    H = 4 * D

    key = jax.random.PRNGKey(0)
    kx, k1, k2, k3, k4 = jax.random.split(key, 5)

    # torch.nn.Linear-style init (U[-1/sqrt(fan_in), 1/sqrt(fan_in)]),
    # stored as (in, out).
    bound1 = 1.0 / math.sqrt(D)
    bound2 = 1.0 / math.sqrt(H)
    w1 = jax.random.uniform(k1, (D, H), jnp.float32, -bound1, bound1)
    b1 = jax.random.uniform(k2, (H,), jnp.float32, -bound1, bound1)
    w2 = jax.random.uniform(k3, (H, D), jnp.float32, -bound2, bound2)
    b2 = jax.random.uniform(k4, (D,), jnp.float32, -bound2, bound2)

    x = jax.random.normal(kx, (B, T, D), jnp.float32)

    ref = mlp_reference(x, w1, b1, w2, b2)

    # Exact-precision path (f32 compute): tight tolerance.
    mlp_f32 = make_mlp(w1, b1, w2, b2, compute_dtype=jnp.float32)
    out_f32 = jax.block_until_ready(mlp_f32(x))
    assert out_f32.shape == (B, T, D)
    assert jnp.allclose(out_f32, ref, atol=1e-5, rtol=1e-5), "f32 mismatch"

    # Performance path (bf16 inputs/weights, f32 accumulation): loose tolerance.
    mlp_bf16 = make_mlp(w1, b1, w2, b2, compute_dtype=jnp.bfloat16)
    out_bf16 = jax.block_until_ready(mlp_bf16(x))
    assert out_bf16.shape == (B, T, D)
    assert jnp.allclose(out_bf16, ref, atol=5e-2, rtol=5e-2), "bf16 mismatch"

    print("KERNEL_OK")
</pallas_src>

<mosaic_0001>
module attributes {stable_mosaic.version = 11 : i64} {
  func.func @mlp_kernel(%arg0: i32, %arg1: i32, %arg2: memref<128x128xf32, #tpu.memory_space<vmem>>, %arg3: memref<128x128xf32, #tpu.memory_space<vmem>>, %arg4: memref<1x128xf32, #tpu.memory_space<vmem>>, %arg5: memref<128x128xf32, #tpu.memory_space<vmem>>, %arg6: memref<1x128xf32, #tpu.memory_space<vmem>>, %arg7: memref<128x128xf32, #tpu.memory_space<vmem>>, %arg8: memref<128x128xf32, #tpu.memory_space<vmem>>) attributes {dimension_semantics = [#tpu.dimension_semantics<parallel>, #tpu.dimension_semantics<arbitrary>], iteration_bounds = array<i64: 1, 1>, scalar_prefetch = 0 : i64, scratch_operands = 1 : i64, tpu.core_type = #tpu.core_type<tc>, window_params = [{transform_indices = @transform_0, window_bounds = array<i64: 128, 128>}, {transform_indices = @transform_1, window_bounds = array<i64: 128, 128>}, {transform_indices = @transform_2, window_bounds = array<i64: 1, 128>}, {transform_indices = @transform_3, window_bounds = array<i64: 128, 128>}, {pipeline_mode = #tpu.pipeline_mode<synchronous>, transform_indices = @transform_4, window_bounds = array<i64: 1, 128>}, {transform_indices = @transform_5, window_bounds = array<i64: 128, 128>}]} {
    %c0_i32 = arith.constant 0 : i32
    %0 = arith.cmpi eq, %arg1, %c0_i32 : i32
    %1 = arith.extui %0 : i1 to i32
    %c0_i32_0 = arith.constant 0 : i32
    %2 = arith.cmpi ne, %1, %c0_i32_0 : i32
    scf.if %2 {
      %cst_19 = arith.constant 0.000000e+00 : f32
      %30 = vector.broadcast %cst_19 : f32 to vector<128x128xf32>
      %c0_20 = arith.constant 0 : index
      %c0_21 = arith.constant 0 : index
      %31 = vector.load %arg8[%c0_20, %c0_21] : memref<128x128xf32, #tpu.memory_space<vmem>>, vector<128x128xf32>
      tpu.vector_store %arg8[%c0_20, %c0_21], %30 {strides = array<i32>} : memref<128x128xf32, #tpu.memory_space<vmem>>, vector<128x128xf32>,
    } else {
    }
    %c0 = arith.constant 0 : index
    %c0_1 = arith.constant 0 : index
    %3 = vector.load %arg2[%c0, %c0_1] : memref<128x128xf32, #tpu.memory_space<vmem>>, vector<128x128xf32>
    %c0_2 = arith.constant 0 : index
    %c0_3 = arith.constant 0 : index
    %4 = vector.load %arg3[%c0_2, %c0_3] : memref<128x128xf32, #tpu.memory_space<vmem>>, vector<128x128xf32>
    %cst = arith.constant dense<0.000000e+00> : vector<128x128xf32>
    %5 = tpu.matmul %3, %4, %cst {dimension_numbers = #tpu.dot_dimension_numbers<[1], [0], [0], [1], [0, 0, 1, 1], [], []>} : vector<128x128xf32>, vector<128x128xf32>, vector<128x128xf32> -> vector<128x128xf32>
    %c0_4 = arith.constant 0 : index
    %c0_5 = arith.constant 0 : index
    %6 = vector.load %arg4[%c0_4, %c0_5] : memref<1x128xf32, #tpu.memory_space<vmem>>, vector<1x128xf32>
    %7 = vector.broadcast %6 : vector<1x128xf32> to vector<128x128xf32>
    %8 = arith.addf %5, %7 : vector<128x128xf32>
    %cst_6 = arith.constant 0.797884583 : f32
    %9 = vector.broadcast %cst_6 : f32 to vector<128x128xf32>
    %10 = arith.mulf %9, %8 : vector<128x128xf32>
    %11 = arith.mulf %8, %8 : vector<128x128xf32>
    %12 = arith.mulf %11, %8 : vector<128x128xf32>
    %cst_7 = arith.constant 0.0356774069 : f32
    %13 = vector.broadcast %cst_7 : f32 to vector<128x128xf32>
    %14 = arith.mulf %13, %12 : vector<128x128xf32>
    %15 = arith.addf %10, %14 : vector<128x128xf32>
    %16 = math.tanh %15 : vector<128x128xf32>
    %cst_8 = arith.constant 5.000000e-01 : f32
    %17 = vector.broadcast %cst_8 : f32 to vector<128x128xf32>
    %18 = arith.mulf %17, %8 : vector<128x128xf32>
    %cst_9 = arith.constant 1.000000e+00 : f32
    %19 = vector.broadcast %cst_9 : f32 to vector<128x128xf32>
    %20 = arith.addf %19, %16 : vector<128x128xf32>
    %21 = arith.mulf %18, %20 : vector<128x128xf32>
    %c0_10 = arith.constant 0 : index
    %c0_11 = arith.constant 0 : index
    %22 = vector.load %arg8[%c0_10, %c0_11] : memref<128x128xf32, #tpu.memory_space<vmem>>, vector<128x128xf32>
    %c0_12 = arith.constant 0 : index
    %c0_13 = arith.constant 0 : index
    %23 = vector.load %arg5[%c0_12, %c0_13] : memref<128x128xf32, #tpu.memory_space<vmem>>, vector<128x128xf32>
    %cst_14 = arith.constant dense<0.000000e+00> : vector<128x128xf32>
    %24 = tpu.matmul %21, %23, %cst_14 {dimension_numbers = #tpu.dot_dimension_numbers<[1], [0], [0], [1], [0, 0, 1, 1], [], []>} : vector<128x128xf32>, vector<128x128xf32>, vector<128x128xf32> -> vector<128x128xf32>
    %25 = arith.addf %22, %24 : vector<128x128xf32>
    %c0_15 = arith.constant 0 : index
    %c0_16 = arith.constant 0 : index
    %26 = vector.load %arg8[%c0_15, %c0_16] : memref<128x128xf32, #tpu.memory_space<vmem>>, vector<128x128xf32>
    tpu.vector_store %arg8[%c0_15, %c0_16], %25 {strides = array<i32>} : memref<128x128xf32, #tpu.memory_space<vmem>>, vector<128x128xf32>,
    %c0_i32_17 = arith.constant 0 : i32
    %27 = arith.cmpi eq, %arg1, %c0_i32_17 : i32
    %28 = arith.extui %27 : i1 to i32
    %c0_i32_18 = arith.constant 0 : i32
    %29 = arith.cmpi ne, %28, %c0_i32_18 : i32
    scf.if %29 {
      %c0_19 = arith.constant 0 : index
      %c0_20 = arith.constant 0 : index
      %30 = vector.load %arg8[%c0_19, %c0_20] : memref<128x128xf32, #tpu.memory_space<vmem>>, vector<128x128xf32>
      %c0_21 = arith.constant 0 : index
      %c0_22 = arith.constant 0 : index
      %31 = vector.load %arg6[%c0_21, %c0_22] : memref<1x128xf32, #tpu.memory_space<vmem>>, vector<1x128xf32>
      %32 = vector.broadcast %31 : vector<1x128xf32> to vector<128x128xf32>
      %33 = arith.addf %30, %32 : vector<128x128xf32>
      %c0_23 = arith.constant 0 : index
      %c0_24 = arith.constant 0 : index
      %34 = vector.load %arg7[%c0_23, %c0_24] : memref<128x128xf32, #tpu.memory_space<vmem>>, vector<128x128xf32>
      tpu.vector_store %arg7[%c0_23, %c0_24], %33 {strides = array<i32>} : memref<128x128xf32, #tpu.memory_space<vmem>>, vector<128x128xf32>,
    } else {
    }
    return
  }
  func.func @transform_0(%arg0: i32, %arg1: i32) -> (i32, i32) {
    %c0_i32 = arith.constant 0 : i32
    %c0_i32_0 = arith.constant 0 : i32
    return %arg0, %c0_i32 : i32, i32
  }
  func.func @transform_1(%arg0: i32, %arg1: i32) -> (i32, i32) {
    %c0_i32 = arith.constant 0 : i32
    %c0_i32_0 = arith.constant 0 : i32
    return %c0_i32, %arg1 : i32, i32
  }
  func.func @transform_2(%arg0: i32, %arg1: i32) -> (i32, i32) {
    %c0_i32 = arith.constant 0 : i32
    %c0_i32_0 = arith.constant 0 : i32
    return %c0_i32, %arg1 : i32, i32
  }
  func.func @transform_3(%arg0: i32, %arg1: i32) -> (i32, i32) {
    %c0_i32 = arith.constant 0 : i32
    %c0_i32_0 = arith.constant 0 : i32
    return %arg1, %c0_i32 : i32, i32
  }
  func.func @transform_4(%arg0: i32, %arg1: i32) -> (i32, i32) {
    %c0_i32 = arith.constant 0 : i32
    %c0_i32_0 = arith.constant 0 : i32
    %c0_i32_1 = arith.constant 0 : i32
    return %c0_i32, %c0_i32_0 : i32, i32
  }
  func.func @transform_5(%arg0: i32, %arg1: i32) -> (i32, i32) {
    %c0_i32 = arith.constant 0 : i32
    %c0_i32_0 = arith.constant 0 : i32
    return %arg0, %c0_i32 : i32, i32
  }
}

</mosaic_0001>

<llo_original>
// kernel: tpu_custom_call.1
$region0: #{tpu_custom_call.1}
  #allocation0 [shape = 'u32[]', space=smem, size = 0x4, offset = 0x4, fixed_abs, tag = 'smem constant byte address 0x4 - core index']
  #allocation1 [shape = 'u32[144,128]{1,0:T(1,128)}', space=vmem, size = 0x12000, scoped, tag = 'internal scratch']
  #allocation2 [shape = 'f32[128,128]{1,0:T(8,128)}', space=vmem, size = 0x10000, scoped, tag = 'scratch operand']
  %s0 = inlined_call_operand.hbm [shape: f32[128,128], index: 0, kind: input, shape index: {}]
  %s1 = inlined_call_operand.hbm [shape: f32[128,128], index: 1, kind: input, shape index: {}]
  %s2 = inlined_call_operand.vmem [shape: f32[1,128], index: 2, kind: input, shape index: {}]
  %s3 = inlined_call_operand.hbm [shape: f32[128,128], index: 3, kind: input, shape index: {}]
  %s4 = inlined_call_operand.vmem [shape: f32[1,128], index: 4, kind: input, shape index: {}]
  %s5 = inlined_call_operand.hbm [shape: f32[128,128], index: 5, kind: output, shape index: {}]
  %s6 = sld [smem:[#allocation0]]
  $region50: #{tpu_custom_call.1} parent=0
    _
  %s8 = ssub.s32 1, %s6
  %s9 = scalar_select 0, %s8, %s6
  $region1: #{tpu_custom_call.1} parent=0
    #allocation3 [shape = 'u8[65536]{0}', space=vmem, size = 0x10000, scoped, tag = 'input window, operand 0, single buffered']
    #allocation4 [shape = 's32[1]{0}', space=sflag, size = 0x4, scoped, tag = 'scoped memory for tpu_custom_call.1']
    #allocation5 [shape = 's32[1]{0}', space=sflag, size = 0x4, scoped, tag = 'scoped memory for tpu_custom_call.1']
    #allocation6 [shape = 'u8[65536]{0}', space=vmem, size = 0x10000, scoped, tag = 'input window, operand 1, single buffered']
    #allocation7 [shape = 's32[1]{0}', space=sflag, size = 0x4, scoped, tag = 'scoped memory for tpu_custom_call.1']
    #allocation8 [shape = 'u8[65536]{0}', space=vmem, size = 0x10000, scoped, tag = 'input window, operand 3, single buffered']
    #allocation9 [shape = 'u8[65536]{0}', space=vmem, size = 0x10000, scoped, tag = 'output window, operand 0, single buffered']
    %10 = vsyncpa [#allocation4], 0
    %11 = vsyncpa [#allocation7], 0
    %12 = vsyncpa [#allocation5], 0
    // Predicated region
    $region2: #{tpu_custom_call.1} parent=1 // pred_check
      _
    $region3: #{tpu_custom_call.1} parent=1 // pred_check_branch
      %14 = sbr.rel (0) target = $region5
    $region4: #{tpu_custom_call.1} parent=1 // pred_region
      %s16 = ssub.s32 2048, 2048
      %17 = vsyncadd [#allocation4], %s16
      %s18 = sshll.u32 [#allocation3], 4
      %s19 = int_to_ptr.vmem [resolvable:$true] %s18
      %24 = dma.hbm_to_vmem [thread:$0]  %s0, 2048, %s19, [#allocation4], 128, 128, 8
    $region5: #{tpu_custom_call.1} parent=1 // pred_fallthru
      _
    // Predicated region
    $region6: #{tpu_custom_call.1} parent=1 // pred_check
      _
    $region7: #{tpu_custom_call.1} parent=1 // pred_check_branch
      %26 = sbr.rel (0) target = $region9
    $region8: #{tpu_custom_call.1} parent=1 // pred_region
      %s28 = ssub.s32 2048, 2048
      %29 = vsyncadd [#allocation7], %s28
      %s30 = sshll.u32 [#allocation6], 4
      %s31 = int_to_ptr.vmem [resolvable:$true] %s30
      %36 = dma.hbm_to_vmem [thread:$0]  %s1, 2048, %s31, [#allocation7], 128, 128, 8
    $region9: #{tpu_custom_call.1} parent=1 // pred_fallthru
      _
    // Predicated region
    $region10: #{tpu_custom_call.1} parent=1 // pred_check
      _
    $region11: #{tpu_custom_call.1} parent=1 // pred_check_branch
      %38 = sbr.rel (0) target = $region13
    $region12: #{tpu_custom_call.1} parent=1 // pred_region
      _
    $region13: #{tpu_custom_call.1} parent=1 // pred_fallthru
      _
    // Predicated region
    $region14: #{tpu_custom_call.1} parent=1 // pred_check
      _
    $region15: #{tpu_custom_call.1} parent=1 // pred_check_branch
      %40 = sbr.rel (0) target = $region17
    $region16: #{tpu_custom_call.1} parent=1 // pred_region
      %s42 = ssub.s32 2048, 2048
      %43 = vsyncadd [#allocation7], %s42
      %s44 = sshll.u32 [#allocation8], 4
      %s45 = int_to_ptr.vmem [resolvable:$true] %s44
      %50 = dma.hbm_to_vmem [thread:$0]  %s3, 2048, %s45, [#allocation7], 128, 128, 8
    $region17: #{tpu_custom_call.1} parent=1 // pred_fallthru
      _
    // Predicated region
    $region18: #{tpu_custom_call.1} parent=1 // pred_check
      _
    $region19: #{tpu_custom_call.1} parent=1 // pred_check_branch
      %52 = sbr.rel (0) target = $region21
    $region20: #{tpu_custom_call.1} parent=1 // pred_region
      _
    $region21: #{tpu_custom_call.1} parent=1 // pred_fallthru
      _
    // Predicated region
    $region22: #{tpu_custom_call.1} parent=1 // pred_check
      _
    $region23: #{tpu_custom_call.1} parent=1 // pred_check_branch
      %54 = sbr.rel (0) target = $region25
    $region24: #{tpu_custom_call.1} parent=1 // pred_region
      %55 = dma.done [#allocation4], 2048
    $region25: #{tpu_custom_call.1} parent=1 // pred_fallthru
      _
    // Predicated region
    $region26: #{tpu_custom_call.1} parent=1 // pred_check
      _
    $region27: #{tpu_custom_call.1} parent=1 // pred_check_branch
      %57 = sbr.rel (0) target = $region29
    $region28: #{tpu_custom_call.1} parent=1 // pred_region
      %58 = dma.done [#allocation7], 2048
    $region29: #{tpu_custom_call.1} parent=1 // pred_fallthru
      _
    // Predicated region
    $region30: #{tpu_custom_call.1} parent=1 // pred_check
      _
    $region31: #{tpu_custom_call.1} parent=1 // pred_check_branch
      %60 = sbr.rel (0) target = $region33
    $region32: #{tpu_custom_call.1} parent=1 // pred_region
      %61 = dma.done [#allocation7], 2048
    $region33: #{tpu_custom_call.1} parent=1 // pred_fallthru
      _
    %p62 = scmp.eq.s32.totalorder 0, 0
    // Predicated region
    $region34: #{tpu_custom_call.1} parent=1 // pred_check
      %p63 = pneg %p62
    $region35: #{tpu_custom_call.1} parent=1 // pred_check_branch
      %65 = sbr.rel (%p63) target = $region37
    $region36: #{tpu_custom_call.1} parent=1 // pred_region
      %66 = vst [vmem:[#allocation2] sm:$0xff] 0.0
      %67 = vst [vmem:[#allocation2 + $0x8] sm:$0xff] 0.0
      %68 = vst [vmem:[#allocation2 + $0x10] sm:$0xff] 0.0
      %69 = vst [vmem:[#allocation2 + $0x18] sm:$0xff] 0.0
      %70 = vst [vmem:[#allocation2 + $0x20] sm:$0xff] 0.0
      %71 = vst [vmem:[#allocation2 + $0x28] sm:$0xff] 0.0
      %72 = vst [vmem:[#allocation2 + $0x30] sm:$0xff] 0.0
      %73 = vst [vmem:[#allocation2 + $0x38] sm:$0xff] 0.0
      %74 = vst [vmem:[#allocation2 + $0x40] sm:$0xff] 0.0
      %75 = vst [vmem:[#allocation2 + $0x48] sm:$0xff] 0.0
      %76 = vst [vmem:[#allocation2 + $0x50] sm:$0xff] 0.0
      %77 = vst [vmem:[#allocation2 + $0x58] sm:$0xff] 0.0
      %78 = vst [vmem:[#allocation2 + $0x60] sm:$0xff] 0.0
      %79 = vst [vmem:[#allocation2 + $0x68] sm:$0xff] 0.0
      %80 = vst [vmem:[#allocation2 + $0x70] sm:$0xff] 0.0
      %81 = vst [vmem:[#allocation2 + $0x78] sm:$0xff] 0.0
    $region37: #{tpu_custom_call.1} parent=1 // pred_fallthru
      _
    %v82 = vld [vmem:[#allocation3] sm:$0xff]
    %v83 = vld [vmem:[#allocation3 + $0x8] sm:$0xff]
    %v84 = vld [vmem:[#allocation3 + $0x10] sm:$0xff]
    %v85 = vld [vmem:[#allocation3 + $0x18] sm:$0xff]
    %v86 = vld [vmem:[#allocation3 + $0x20] sm:$0xff]
    %v87 = vld [vmem:[#allocation3 + $0x28] sm:$0xff]
    %v88 = vld [vmem:[#allocation3 + $0x30] sm:$0xff]
    %v89 = vld [vmem:[#allocation3 + $0x38] sm:$0xff]
    %v90 = vld [vmem:[#allocation3 + $0x40] sm:$0xff]
    %v91 = vld [vmem:[#allocation3 + $0x48] sm:$0xff]
    %v92 = vld [vmem:[#allocation3 + $0x50] sm:$0xff]
    %v93 = vld [vmem:[#allocation3 + $0x58] sm:$0xff]
    %v94 = vld [vmem:[#allocation3 + $0x60] sm:$0xff]
    %v95 = vld [vmem:[#allocation3 + $0x68] sm:$0xff]
    %v96 = vld [vmem:[#allocation3 + $0x70] sm:$0xff]
    %v97 = vld [vmem:[#allocation3 + $0x78] sm:$0xff]
    %v98 = vld [vmem:[#allocation6] sm:$0xff]
    %v99 = vld [vmem:[#allocation6 + $0x8] sm:$0xff]
    %v100 = vld [vmem:[#allocation6 + $0x10] sm:$0xff]
    %v101 = vld [vmem:[#allocation6 + $0x18] sm:$0xff]
    %v102 = vld [vmem:[#allocation6 + $0x20] sm:$0xff]
    %v103 = vld [vmem:[#allocation6 + $0x28] sm:$0xff]
    %v104 = vld [vmem:[#allocation6 + $0x30] sm:$0xff]
    %v105 = vld [vmem:[#allocation6 + $0x38] sm:$0xff]
    %v106 = vld [vmem:[#allocation6 + $0x40] sm:$0xff]
    %v107 = vld [vmem:[#allocation6 + $0x48] sm:$0xff]
    %v108 = vld [vmem:[#allocation6 + $0x50] sm:$0xff]
    %v109 = vld [vmem:[#allocation6 + $0x58] sm:$0xff]
    %v110 = vld [vmem:[#allocation6 + $0x60] sm:$0xff]
    %v111 = vld [vmem:[#allocation6 + $0x68] sm:$0xff]
    %v112 = vld [vmem:[#allocation6 + $0x70] sm:$0xff]
    %v113 = vld [vmem:[#allocation6 + $0x78] sm:$0xff]
    %v114 = vld [vmem:[%s2] sm:$0x1]
    %v116 = vlaneseq
    %v117 = vshrl.u32 %v116, 7
    %v118 = vsub.s32 0, %v117
    %v119 = vrot.slane %v114, %v118
    %121 = vmatprep.subr.mxu0 0.0
    %122 = vmatpush1.msra.mxu0 %v113
    %123 = vmatprep.subr.mxu0 0.0
    %124 = vmatpush1.msra.mxu0 %v112
    %125 = vmatprep.subr.mxu0 0.0
    %126 = vmatpush1.msra.mxu0 %v111
    %127 = vmatprep.subr.mxu0 0.0
    %128 = vmatpush1.msra.mxu0 %v110
    %129 = vmatprep.subr.mxu0 0.0
    %130 = vmatpush1.msra.mxu0 %v109
    %131 = vmatprep.subr.mxu0 0.0
    %132 = vmatpush1.msra.mxu0 %v108
    %133 = vmatprep.subr.mxu0 0.0
    %134 = vmatpush1.msra.mxu0 %v107
    %135 = vmatprep.subr.mxu0 0.0
    %136 = vmatpush1.msra.mxu0 %v106
    %137 = vmatprep.subr.mxu0 0.0
    %138 = vmatpush1.msra.mxu0 %v105
    %139 = vmatprep.subr.mxu0 0.0
    %140 = vmatpush1.msra.mxu0 %v104
    %141 = vmatprep.subr.mxu0 0.0
    %142 = vmatpush1.msra.mxu0 %v103
    %143 = vmatprep.subr.mxu0 0.0
    %144 = vmatpush1.msra.mxu0 %v102
    %145 = vmatprep.subr.mxu0 0.0
    %146 = vmatpush1.msra.mxu0 %v101
    %147 = vmatprep.subr.mxu0 0.0
    %148 = vmatpush1.msra.mxu0 %v100
    %149 = vmatprep.subr.mxu0 0.0
    %150 = vmatpush1.msra.mxu0 %v99
    %151 = vmatprep.subr.mxu0 0.0
    %152 = vmatpush1.msra.mxu0 %v98
    %153 = vmatprep.subr.mxu0 0.0
    %154 = vmatpush2.msra.mxu0 0.0
    %155 = vmatprep.subr.mxu0 0.0
    %156 = vmatpush2.msra.mxu0 0.0
    %157 = vmatprep.subr.mxu0 0.0
    %158 = vmatpush2.msra.mxu0 0.0
    %159 = vmatprep.subr.mxu0 0.0
    %160 = vmatpush2.msra.mxu0 0.0
    %161 = vmatprep.subr.mxu0 0.0
    %162 = vmatpush2.msra.mxu0 0.0
    %163 = vmatprep.subr.mxu0 0.0
    %164 = vmatpush2.msra.mxu0 0.0
    %165 = vmatprep.subr.mxu0 0.0
    %166 = vmatpush2.msra.mxu0 0.0
    %167 = vmatprep.subr.mxu0 0.0
    %168 = vmatpush2.msra.mxu0 0.0
    %169 = vmatprep.subr.mxu0 0.0
    %170 = vmatpush2.msra.mxu0 0.0
    %171 = vmatprep.subr.mxu0 0.0
    %172 = vmatpush2.msra.mxu0 0.0
    %173 = vmatprep.subr.mxu0 0.0
    %174 = vmatpush2.msra.mxu0 0.0
    %175 = vmatprep.subr.mxu0 0.0
    %176 = vmatpush2.msra.mxu0 0.0
    %177 = vmatprep.subr.mxu0 0.0
    %178 = vmatpush2.msra.mxu0 0.0
    %179 = vmatprep.subr.mxu0 0.0
    %180 = vmatpush2.msra.mxu0 0.0
    %181 = vmatprep.subr.mxu0 0.0
    %182 = vmatpush2.msra.mxu0 0.0
    %183 = vmatprep.subr.mxu0 0.0
    %184 = vmatpush2.msra.mxu0 0.0
    %185 = vmatprep.mubr.f32.mxu0 0.0
    %186 = vmatmul.mubr.f32.gmra.mxu0 %v82
    %v187 = vpop.f32.mrf.mxu0
    %v188 = vadd.f32 %v119, %v187
    %v189 = vpop.f32.mrf.mxu0
    %190 = vmatprep.mubr.f32.mxu0 0.0
    %191 = vmatmul.mubr.f32.gmra.mxu0 %v83
    %v192 = vpop.f32.mrf.mxu0
    %v193 = vadd.f32 %v119, %v192
    %v194 = vpop.f32.mrf.mxu0
    %195 = vmatprep.mubr.f32.mxu0 0.0
    %196 = vmatmul.mubr.f32.gmra.mxu0 %v84
    %v197 = vpop.f32.mrf.mxu0
    %v198 = vadd.f32 %v119, %v197
    %v199 = vpop.f32.mrf.mxu0
    %200 = vmatprep.mubr.f32.mxu0 0.0
    %201 = vmatmul.mubr.f32.gmra.mxu0 %v85
    %v202 = vpop.f32.mrf.mxu0
    %v203 = vadd.f32 %v119, %v202
    %v204 = vpop.f32.mrf.mxu0
    %205 = vmatprep.mubr.f32.mxu0 0.0
    %206 = vmatmul.mubr.f32.gmra.mxu0 %v86
    %v207 = vpop.f32.mrf.mxu0
    %v208 = vadd.f32 %v119, %v207
    %v209 = vpop.f32.mrf.mxu0
    %210 = vmatprep.mubr.f32.mxu0 0.0
    %211 = vmatmul.mubr.f32.gmra.mxu0 %v87
    %v212 = vpop.f32.mrf.mxu0
    %v213 = vadd.f32 %v119, %v212
    %v214 = vpop.f32.mrf.mxu0
    %215 = vmatprep.mubr.f32.mxu0 0.0
    %216 = vmatmul.mubr.f32.gmra.mxu0 %v88
    %v217 = vpop.f32.mrf.mxu0
    %v218 = vadd.f32 %v119, %v217
    %v219 = vpop.f32.mrf.mxu0
    %220 = vmatprep.mubr.f32.mxu0 0.0
    %221 = vmatmul.mubr.f32.gmra.mxu0 %v89
    %v222 = vpop.f32.mrf.mxu0
    %v223 = vadd.f32 %v119, %v222
    %v224 = vpop.f32.mrf.mxu0
    %225 = vmatprep.mubr.f32.mxu0 0.0
    %226 = vmatmul.mubr.f32.gmra.mxu0 %v90
    %v227 = vpop.f32.mrf.mxu0
    %v228 = vadd.f32 %v119, %v227
    %v229 = vpop.f32.mrf.mxu0
    %230 = vmatprep.mubr.f32.mxu0 0.0
    %231 = vmatmul.mubr.f32.gmra.mxu0 %v91
    %v232 = vpop.f32.mrf.mxu0
    %v233 = vadd.f32 %v119, %v232
    %v234 = vpop.f32.mrf.mxu0
    %235 = vmatprep.mubr.f32.mxu0 0.0
    %236 = vmatmul.mubr.f32.gmra.mxu0 %v92
    %v237 = vpop.f32.mrf.mxu0
    %v238 = vadd.f32 %v119, %v237
    %v239 = vpop.f32.mrf.mxu0
    %240 = vmatprep.mubr.f32.mxu0 0.0
    %241 = vmatmul.mubr.f32.gmra.mxu0 %v93
    %v242 = vpop.f32.mrf.mxu0
    %v243 = vadd.f32 %v119, %v242
    %v244 = vpop.f32.mrf.mxu0
    %245 = vmatprep.mubr.f32.mxu0 0.0
    %246 = vmatmul.mubr.f32.gmra.mxu0 %v94
    %v247 = vpop.f32.mrf.mxu0
    %v248 = vadd.f32 %v119, %v247
    %v249 = vpop.f32.mrf.mxu0
    %250 = vmatprep.mubr.f32.mxu0 0.0
    %251 = vmatmul.mubr.f32.gmra.mxu0 %v95
    %v252 = vpop.f32.mrf.mxu0
    %v253 = vadd.f32 %v119, %v252
    %v254 = vpop.f32.mrf.mxu0
    %255 = vmatprep.mubr.f32.mxu0 0.0
    %256 = vmatmul.mubr.f32.gmra.mxu0 %v96
    %v257 = vpop.f32.mrf.mxu0
    %v258 = vadd.f32 %v119, %v257
    %v259 = vpop.f32.mrf.mxu0
    %260 = vmatprep.mubr.f32.mxu0 0.0
    %261 = vmatmul.mubr.f32.gmra.mxu0 %v97
    %v262 = vpop.f32.mrf.mxu0
    %v263 = vadd.f32 %v119, %v262
    %v264 = vpop.f32.mrf.mxu0
    %265 = vdwg.mxu0
    %v266 = vmul.f32 %v188, 0.7978846
    %v267 = vmul.f32 %v193, 0.7978846
    %v268 = vmul.f32 %v198, 0.7978846
    %v269 = vmul.f32 %v203, 0.7978846
    %v270 = vmul.f32 %v208, 0.7978846
    %v271 = vmul.f32 %v213, 0.7978846
    %v272 = vmul.f32 %v218, 0.7978846
    %v273 = vmul.f32 %v223, 0.7978846
    %v274 = vmul.f32 %v228, 0.7978846
    %v275 = vmul.f32 %v233, 0.7978846
    %v276 = vmul.f32 %v238, 0.7978846
    %v277 = vmul.f32 %v243, 0.7978846
    %v278 = vmul.f32 %v248, 0.7978846
    %v279 = vmul.f32 %v253, 0.7978846
    %v280 = vmul.f32 %v258, 0.7978846
    %v281 = vmul.f32 %v263, 0.7978846
    %v282 = vmul.f32 %v188, %v188
    %v283 = vmul.f32 %v193, %v193
    %v284 = vmul.f32 %v198, %v198
    %v285 = vmul.f32 %v203, %v203
    %v286 = vmul.f32 %v208, %v208
    %v287 = vmul.f32 %v213, %v213
    %v288 = vmul.f32 %v218, %v218
    %v289 = vmul.f32 %v223, %v223
    %v290 = vmul.f32 %v228, %v228
    %v291 = vmul.f32 %v233, %v233
    %v292 = vmul.f32 %v238, %v238
    %v293 = vmul.f32 %v243, %v243
    %v294 = vmul.f32 %v248, %v248
    %v295 = vmul.f32 %v253, %v253
    %v296 = vmul.f32 %v258, %v258
    %v297 = vmul.f32 %v263, %v263
    %v298 = vmul.f32 %v282, %v188
    %v299 = vmul.f32 %v283, %v193
    %v300 = vmul.f32 %v284, %v198
    %v301 = vmul.f32 %v285, %v203
    %v302 = vmul.f32 %v286, %v208
    %v303 = vmul.f32 %v287, %v213
    %v304 = vmul.f32 %v288, %v218
    %v305 = vmul.f32 %v289, %v223
    %v306 = vmul.f32 %v290, %v228
    %v307 = vmul.f32 %v291, %v233
    %v308 = vmul.f32 %v292, %v238
    %v309 = vmul.f32 %v293, %v243
    %v310 = vmul.f32 %v294, %v248
    %v311 = vmul.f32 %v295, %v253
    %v312 = vmul.f32 %v296, %v258
    %v313 = vmul.f32 %v297, %v263
    %v314 = vmul.f32 %v298, 0.035677407
    %v315 = vmul.f32 %v299, 0.035677407
    %v316 = vmul.f32 %v300, 0.035677407
    %v317 = vmul.f32 %v301, 0.035677407
    %v318 = vmul.f32 %v302, 0.035677407
    %v319 = vmul.f32 %v303, 0.035677407
    %v320 = vmul.f32 %v304, 0.035677407
    %v321 = vmul.f32 %v305, 0.035677407
    %v322 = vmul.f32 %v306, 0.035677407
    %v323 = vmul.f32 %v307, 0.035677407
    %v324 = vmul.f32 %v308, 0.035677407
    %v325 = vmul.f32 %v309, 0.035677407
    %v326 = vmul.f32 %v310, 0.035677407
    %v327 = vmul.f32 %v311, 0.035677407
    %v328 = vmul.f32 %v312, 0.035677407
    %v329 = vmul.f32 %v313, 0.035677407
    %v330 = vadd.f32 %v266, %v314
    %v331 = vadd.f32 %v267, %v315
    %v332 = vadd.f32 %v268, %v316
    %v333 = vadd.f32 %v269, %v317
    %v334 = vadd.f32 %v270, %v318
    %v335 = vadd.f32 %v271, %v319
    %v336 = vadd.f32 %v272, %v320
    %v337 = vadd.f32 %v273, %v321
    %v338 = vadd.f32 %v274, %v322
    %v339 = vadd.f32 %v275, %v323
    %v340 = vadd.f32 %v276, %v324
    %v341 = vadd.f32 %v277, %v325
    %v342 = vadd.f32 %v278, %v326
    %v343 = vadd.f32 %v279, %v327
    %v344 = vadd.f32 %v280, %v328
    %v345 = vadd.f32 %v281, %v329
    %v346 = vtanh.pop %v330
    %v347 = vtanh.pop %v331
    %v348 = vtanh.pop %v332
    %v349 = vtanh.pop %v333
    %v350 = vtanh.pop %v334
    %v351 = vtanh.pop %v335
    %v352 = vtanh.pop %v336
    %v353 = vtanh.pop %v337
    %v354 = vtanh.pop %v338
    %v355 = vtanh.pop %v339
    %v356 = vtanh.pop %v340
    %v357 = vtanh.pop %v341
    %v358 = vtanh.pop %v342
    %v359 = vtanh.pop %v343
    %v360 = vtanh.pop %v344
    %v361 = vtanh.pop %v345
    %v362 = vmul.f32 %v188, 0.5
    %v363 = vmul.f32 %v193, 0.5
    %v364 = vmul.f32 %v198, 0.5
    %v365 = vmul.f32 %v203, 0.5
    %v366 = vmul.f32 %v208, 0.5
    %v367 = vmul.f32 %v213, 0.5
    %v368 = vmul.f32 %v218, 0.5
    %v369 = vmul.f32 %v223, 0.5
    %v370 = vmul.f32 %v228, 0.5
    %v371 = vmul.f32 %v233, 0.5
    %v372 = vmul.f32 %v238, 0.5
    %v373 = vmul.f32 %v243, 0.5
    %v374 = vmul.f32 %v248, 0.5
    %v375 = vmul.f32 %v253, 0.5
    %v376 = vmul.f32 %v258, 0.5
    %v377 = vmul.f32 %v263, 0.5
    %v378 = vadd.f32 %v346, 1.0
    %v379 = vadd.f32 %v347, 1.0
    %v380 = vadd.f32 %v348, 1.0
    %v381 = vadd.f32 %v349, 1.0
    %v382 = vadd.f32 %v350, 1.0
    %v383 = vadd.f32 %v351, 1.0
    %v384 = vadd.f32 %v352, 1.0
    %v385 = vadd.f32 %v353, 1.0
    %v386 = vadd.f32 %v354, 1.0
    %v387 = vadd.f32 %v355, 1.0
    %v388 = vadd.f32 %v356, 1.0
    %v389 = vadd.f32 %v357, 1.0
    %v390 = vadd.f32 %v358, 1.0
    %v391 = vadd.f32 %v359, 1.0
    %v392 = vadd.f32 %v360, 1.0
    %v393 = vadd.f32 %v361, 1.0
    %v394 = vmul.f32 %v362, %v378
    %v395 = vmul.f32 %v363, %v379
    %v396 = vmul.f32 %v364, %v380
    %v397 = vmul.f32 %v365, %v381
    %v398 = vmul.f32 %v366, %v382
    %v399 = vmul.f32 %v367, %v383
    %v400 = vmul.f32 %v368, %v384
    %v401 = vmul.f32 %v369, %v385
    %v402 = vmul.f32 %v370, %v386
    %v403 = vmul.f32 %v371, %v387
    %v404 = vmul.f32 %v372, %v388
    %v405 = vmul.f32 %v373, %v389
    %v406 = vmul.f32 %v374, %v390
    %v407 = vmul.f32 %v375, %v391
    %v408 = vmul.f32 %v376, %v392
    %v409 = vmul.f32 %v377, %v393
    %v410 = vld [vmem:[#allocation2] sm:$0xff]
    %v411 = vld [vmem:[#allocation2 + $0x8] sm:$0xff]
    %v412 = vld [vmem:[#allocation2 + $0x10] sm:$0xff]
    %v413 = vld [vmem:[#allocation2 + $0x18] sm:$0xff]
    %v414 = vld [vmem:[#allocation2 + $0x20] sm:$0xff]
    %v415 = vld [vmem:[#allocation2 + $0x28] sm:$0xff]
    %v416 = vld [vmem:[#allocation2 + $0x30] sm:$0xff]
    %v417 = vld [vmem:[#allocation2 + $0x38] sm:$0xff]
    %v418 = vld [vmem:[#allocation2 + $0x40] sm:$0xff]
    %v419 = vld [vmem:[#allocation2 + $0x48] sm:$0xff]
    %v420 = vld [vmem:[#allocation2 + $0x50] sm:$0xff]
    %v421 = vld [vmem:[#allocation2 + $0x58] sm:$0xff]
    %v422 = vld [vmem:[#allocation2 + $0x60] sm:$0xff]
    %v423 = vld [vmem:[#allocation2 + $0x68] sm:$0xff]
    %v424 = vld [vmem:[#allocation2 + $0x70] sm:$0xff]
    %v425 = vld [vmem:[#allocation2 + $0x78] sm:$0xff]
    %v426 = vld [vmem:[#allocation8] sm:$0xff]
    %v427 = vld [vmem:[#allocation8 + $0x8] sm:$0xff]
    %v428 = vld [vmem:[#allocation8 + $0x10] sm:$0xff]
    %v429 = vld [vmem:[#allocation8 + $0x18] sm:$0xff]
    %v430 = vld [vmem:[#allocation8 + $0x20] sm:$0xff]
    %v431 = vld [vmem:[#allocation8 + $0x28] sm:$0xff]
    %v432 = vld [vmem:[#allocation8 + $0x30] sm:$0xff]
    %v433 = vld [vmem:[#allocation8 + $0x38] sm:$0xff]
    %v434 = vld [vmem:[#allocation8 + $0x40] sm:$0xff]
    %v435 = vld [vmem:[#allocation8 + $0x48] sm:$0xff]
    %v436 = vld [vmem:[#allocation8 + $0x50] sm:$0xff]
    %v437 = vld [vmem:[#allocation8 + $0x58] sm:$0xff]
    %v438 = vld [vmem:[#allocation8 + $0x60] sm:$0xff]
    %v439 = vld [vmem:[#allocation8 + $0x68] sm:$0xff]
    %v440 = vld [vmem:[#allocation8 + $0x70] sm:$0xff]
    %v441 = vld [vmem:[#allocation8 + $0x78] sm:$0xff]
    %442 = vmatprep.subr.mxu0 0.0
    %443 = vmatpush1.msra.mxu0 %v441
    %444 = vmatprep.subr.mxu0 0.0
    %445 = vmatpush1.msra.mxu0 %v440
    %446 = vmatprep.subr.mxu0 0.0
    %447 = vmatpush1.msra.mxu0 %v439
    %448 = vmatprep.subr.mxu0 0.0
    %449 = vmatpush1.msra.mxu0 %v438
    %450 = vmatprep.subr.mxu0 0.0
    %451 = vmatpush1.msra.mxu0 %v437
    %452 = vmatprep.subr.mxu0 0.0
    %453 = vmatpush1.msra.mxu0 %v436
    %454 = vmatprep.subr.mxu0 0.0
    %455 = vmatpush1.msra.mxu0 %v435
    %456 = vmatprep.subr.mxu0 0.0
    %457 = vmatpush1.msra.mxu0 %v434
    %458 = vmatprep.subr.mxu0 0.0
    %459 = vmatpush1.msra.mxu0 %v433
    %460 = vmatprep.subr.mxu0 0.0
    %461 = vmatpush1.msra.mxu0 %v432
    %462 = vmatprep.subr.mxu0 0.0
    %463 = vmatpush1.msra.mxu0 %v431
    %464 = vmatprep.subr.mxu0 0.0
    %465 = vmatpush1.msra.mxu0 %v430
    %466 = vmatprep.subr.mxu0 0.0
    %467 = vmatpush1.msra.mxu0 %v429
    %468 = vmatprep.subr.mxu0 0.0
    %469 = vmatpush1.msra.mxu0 %v428
    %470 = vmatprep.subr.mxu0 0.0
    %471 = vmatpush1.msra.mxu0 %v427
    %472 = vmatprep.subr.mxu0 0.0
    %473 = vmatpush1.msra.mxu0 %v426
    %474 = vmatprep.subr.mxu0 0.0
    %475 = vmatpush2.msra.mxu0 0.0
    %476 = vmatprep.subr.mxu0 0.0
    %477 = vmatpush2.msra.mxu0 0.0
    %478 = vmatprep.subr.mxu0 0.0
    %479 = vmatpush2.msra.mxu0 0.0
    %480 = vmatprep.subr.mxu0 0.0
    %481 = vmatpush2.msra.mxu0 0.0
    %482 = vmatprep.subr.mxu0 0.0
    %483 = vmatpush2.msra.mxu0 0.0
    %484 = vmatprep.subr.mxu0 0.0
    %485 = vmatpush2.msra.mxu0 0.0
    %486 = vmatprep.subr.mxu0 0.0
    %487 = vmatpush2.msra.mxu0 0.0
    %488 = vmatprep.subr.mxu0 0.0
    %489 = vmatpush2.msra.mxu0 0.0
    %490 = vmatprep.subr.mxu0 0.0
    %491 = vmatpush2.msra.mxu0 0.0
    %492 = vmatprep.subr.mxu0 0.0
    %493 = vmatpush2.msra.mxu0 0.0
    %494 = vmatprep.subr.mxu0 0.0
    %495 = vmatpush2.msra.mxu0 0.0
    %496 = vmatprep.subr.mxu0 0.0
    %497 = vmatpush2.msra.mxu0 0.0
    %498 = vmatprep.subr.mxu0 0.0
    %499 = vmatpush2.msra.mxu0 0.0
    %500 = vmatprep.subr.mxu0 0.0
    %501 = vmatpush2.msra.mxu0 0.0
    %502 = vmatprep.subr.mxu0 0.0
    %503 = vmatpush2.msra.mxu0 0.0
    %504 = vmatprep.subr.mxu0 0.0
    %505 = vmatpush2.msra.mxu0 0.0
    %506 = vmatprep.mubr.f32.mxu0 0.0
    %507 = vmatmul.mubr.f32.gmra.mxu0 %v394
    %v508 = vpop.f32.mrf.mxu0
    %v509 = vadd.f32 0.0, %v508
    %v510 = vpop.f32.mrf.mxu0
    %511 = vmatprep.mubr.f32.mxu0 0.0
    %512 = vmatmul.mubr.f32.gmra.mxu0 %v395
    %v513 = vpop.f32.mrf.mxu0
    %v514 = vadd.f32 0.0, %v513
    %v515 = vpop.f32.mrf.mxu0
    %516 = vmatprep.mubr.f32.mxu0 0.0
    %517 = vmatmul.mubr.f32.gmra.mxu0 %v396
    %v518 = vpop.f32.mrf.mxu0
    %v519 = vadd.f32 0.0, %v518
    %v520 = vpop.f32.mrf.mxu0
    %521 = vmatprep.mubr.f32.mxu0 0.0
    %522 = vmatmul.mubr.f32.gmra.mxu0 %v397
    %v523 = vpop.f32.mrf.mxu0
    %v524 = vadd.f32 0.0, %v523
    %v525 = vpop.f32.mrf.mxu0
    %526 = vmatprep.mubr.f32.mxu0 0.0
    %527 = vmatmul.mubr.f32.gmra.mxu0 %v398
    %v528 = vpop.f32.mrf.mxu0
    %v529 = vadd.f32 0.0, %v528
    %v530 = vpop.f32.mrf.mxu0
    %531 = vmatprep.mubr.f32.mxu0 0.0
    %532 = vmatmul.mubr.f32.gmra.mxu0 %v399
    %v533 = vpop.f32.mrf.mxu0
    %v534 = vadd.f32 0.0, %v533
    %v535 = vpop.f32.mrf.mxu0
    %536 = vmatprep.mubr.f32.mxu0 0.0
    %537 = vmatmul.mubr.f32.gmra.mxu0 %v400
    %v538 = vpop.f32.mrf.mxu0
    %v539 = vadd.f32 0.0, %v538
    %v540 = vpop.f32.mrf.mxu0
    %541 = vmatprep.mubr.f32.mxu0 0.0
    %542 = vmatmul.mubr.f32.gmra.mxu0 %v401
    %v543 = vpop.f32.mrf.mxu0
    %v544 = vadd.f32 0.0, %v543
    %v545 = vpop.f32.mrf.mxu0
    %546 = vmatprep.mubr.f32.mxu0 0.0
    %547 = vmatmul.mubr.f32.gmra.mxu0 %v402
    %v548 = vpop.f32.mrf.mxu0
    %v549 = vadd.f32 0.0, %v548
    %v550 = vpop.f32.mrf.mxu0
    %551 = vmatprep.mubr.f32.mxu0 0.0
    %552 = vmatmul.mubr.f32.gmra.mxu0 %v403
    %v553 = vpop.f32.mrf.mxu0
    %v554 = vadd.f32 0.0, %v553
    %v555 = vpop.f32.mrf.mxu0
    %556 = vmatprep.mubr.f32.mxu0 0.0
    %557 = vmatmul.mubr.f32.gmra.mxu0 %v404
    %v558 = vpop.f32.mrf.mxu0
    %v559 = vadd.f32 0.0, %v558
    %v560 = vpop.f32.mrf.mxu0
    %561 = vmatprep.mubr.f32.mxu0 0.0
    %562 = vmatmul.mubr.f32.gmra.mxu0 %v405
    %v563 = vpop.f32.mrf.mxu0
    %v564 = vadd.f32 0.0, %v563
    %v565 = vpop.f32.mrf.mxu0
    %566 = vmatprep.mubr.f32.mxu0 0.0
    %567 = vmatmul.mubr.f32.gmra.mxu0 %v406
    %v568 = vpop.f32.mrf.mxu0
    %v569 = vadd.f32 0.0, %v568
    %v570 = vpop.f32.mrf.mxu0
    %571 = vmatprep.mubr.f32.mxu0 0.0
    %572 = vmatmul.mubr.f32.gmra.mxu0 %v407
    %v573 = vpop.f32.mrf.mxu0
    %v574 = vadd.f32 0.0, %v573
    %v575 = vpop.f32.mrf.mxu0
    %576 = vmatprep.mubr.f32.mxu0 0.0
    %577 = vmatmul.mubr.f32.gmra.mxu0 %v408
    %v578 = vpop.f32.mrf.mxu0
    %v579 = vadd.f32 0.0, %v578
    %v580 = vpop.f32.mrf.mxu0
    %581 = vmatprep.mubr.f32.mxu0 0.0
    %582 = vmatmul.mubr.f32.gmra.mxu0 %v409
    %v583 = vpop.f32.mrf.mxu0
    %v584 = vadd.f32 0.0, %v583
    %v585 = vpop.f32.mrf.mxu0
    %586 = vdwg.mxu0
    %v587 = vadd.f32 %v410, %v509
    %v588 = vadd.f32 %v411, %v514
    %v589 = vadd.f32 %v412, %v519
    %v590 = vadd.f32 %v413, %v524
    %v591 = vadd.f32 %v414, %v529
    %v592 = vadd.f32 %v415, %v534
    %v593 = vadd.f32 %v416, %v539
    %v594 = vadd.f32 %v417, %v544
    %v595 = vadd.f32 %v418, %v549
    %v596 = vadd.f32 %v419, %v554
    %v597 = vadd.f32 %v420, %v559
    %v598 = vadd.f32 %v421, %v564
    %v599 = vadd.f32 %v422, %v569
    %v600 = vadd.f32 %v423, %v574
    %v601 = vadd.f32 %v424, %v579
    %v602 = vadd.f32 %v425, %v584
    %603 = vst [vmem:[#allocation2] sm:$0xff] %v587
    %604 = vst [vmem:[#allocation2 + $0x8] sm:$0xff] %v588
    %605 = vst [vmem:[#allocation2 + $0x10] sm:$0xff] %v589
    %606 = vst [vmem:[#allocation2 + $0x18] sm:$0xff] %v590
    %607 = vst [vmem:[#allocation2 + $0x20] sm:$0xff] %v591
    %608 = vst [vmem:[#allocation2 + $0x28] sm:$0xff] %v592
    %609 = vst [vmem:[#allocation2 + $0x30] sm:$0xff] %v593
    %610 = vst [vmem:[#allocation2 + $0x38] sm:$0xff] %v594
    %611 = vst [vmem:[#allocation2 + $0x40] sm:$0xff] %v595
    %612 = vst [vmem:[#allocation2 + $0x48] sm:$0xff] %v596
    %613 = vst [vmem:[#allocation2 + $0x50] sm:$0xff] %v597
    %614 = vst [vmem:[#allocation2 + $0x58] sm:$0xff] %v598
    %615 = vst [vmem:[#allocation2 + $0x60] sm:$0xff] %v599
    %616 = vst [vmem:[#allocation2 + $0x68] sm:$0xff] %v600
    %617 = vst [vmem:[#allocation2 + $0x70] sm:$0xff] %v601
    %618 = vst [vmem:[#allocation2 + $0x78] sm:$0xff] %v602
    // Predicated region
    $region38: #{tpu_custom_call.1} parent=1 // pred_check
      %p619 = pneg %p62
    $region39: #{tpu_custom_call.1} parent=1 // pred_check_branch
      %621 = sbr.rel (%p619) target = $region41
    $region40: #{tpu_custom_call.1} parent=1 // pred_region
      %v622 = vld [vmem:[#allocation2] sm:$0xff]
      %v623 = vld [vmem:[#allocation2 + $0x8] sm:$0xff]
      %v624 = vld [vmem:[#allocation2 + $0x10] sm:$0xff]
      %v625 = vld [vmem:[#allocation2 + $0x18] sm:$0xff]
      %v626 = vld [vmem:[#allocation2 + $0x20] sm:$0xff]
      %v627 = vld [vmem:[#allocation2 + $0x28] sm:$0xff]
      %v628 = vld [vmem:[#allocation2 + $0x30] sm:$0xff]
      %v629 = vld [vmem:[#allocation2 + $0x38] sm:$0xff]
      %v630 = vld [vmem:[#allocation2 + $0x40] sm:$0xff]
      %v631 = vld [vmem:[#allocation2 + $0x48] sm:$0xff]
      %v632 = vld [vmem:[#allocation2 + $0x50] sm:$0xff]
      %v633 = vld [vmem:[#allocation2 + $0x58] sm:$0xff]
      %v634 = vld [vmem:[#allocation2 + $0x60] sm:$0xff]
      %v635 = vld [vmem:[#allocation2 + $0x68] sm:$0xff]
      %v636 = vld [vmem:[#allocation2 + $0x70] sm:$0xff]
      %v637 = vld [vmem:[#allocation2 + $0x78] sm:$0xff]
      %v638 = vld [vmem:[%s4] sm:$0x1]
      %v640 = vlaneseq
      %v641 = vshrl.u32 %v640, 7
      %v642 = vsub.s32 0, %v641
      %v643 = vrot.slane %v638, %v642
      %v645 = vadd.f32 %v622, %v643
      %v646 = vadd.f32 %v623, %v643
      %v647 = vadd.f32 %v624, %v643
      %v648 = vadd.f32 %v625, %v643
      %v649 = vadd.f32 %v626, %v643
      %v650 = vadd.f32 %v627, %v643
      %v651 = vadd.f32 %v628, %v643
      %v652 = vadd.f32 %v629, %v643
      %v653 = vadd.f32 %v630, %v643
      %v654 = vadd.f32 %v631, %v643
      %v655 = vadd.f32 %v632, %v643
      %v656 = vadd.f32 %v633, %v643
      %v657 = vadd.f32 %v634, %v643
      %v658 = vadd.f32 %v635, %v643
      %v659 = vadd.f32 %v636, %v643
      %v660 = vadd.f32 %v637, %v643
      %661 = vst [vmem:[#allocation9] sm:$0xff] %v645
      %662 = vst [vmem:[#allocation9 + $0x8] sm:$0xff] %v646
      %663 = vst [vmem:[#allocation9 + $0x10] sm:$0xff] %v647
      %664 = vst [vmem:[#allocation9 + $0x18] sm:$0xff] %v648
      %665 = vst [vmem:[#allocation9 + $0x20] sm:$0xff] %v649
      %666 = vst [vmem:[#allocation9 + $0x28] sm:$0xff] %v650
      %667 = vst [vmem:[#allocation9 + $0x30] sm:$0xff] %v651
      %668 = vst [vmem:[#allocation9 + $0x38] sm:$0xff] %v652
      %669 = vst [vmem:[#allocation9 + $0x40] sm:$0xff] %v653
      %670 = vst [vmem:[#allocation9 + $0x48] sm:$0xff] %v654
      %671 = vst [vmem:[#allocation9 + $0x50] sm:$0xff] %v655
      %672 = vst [vmem:[#allocation9 + $0x58] sm:$0xff] %v656
      %673 = vst [vmem:[#allocation9 + $0x60] sm:$0xff] %v657
      %674 = vst [vmem:[#allocation9 + $0x68] sm:$0xff] %v658
      %675 = vst [vmem:[#allocation9 + $0x70] sm:$0xff] %v659
      %676 = vst [vmem:[#allocation9 + $0x78] sm:$0xff] %v660
    $region41: #{tpu_custom_call.1} parent=1 // pred_fallthru
      _
    // Predicated region
    $region42: #{tpu_custom_call.1} parent=1 // pred_check
      _
    $region43: #{tpu_custom_call.1} parent=1 // pred_check_branch
      %678 = sbr.rel (0) target = $region45
    $region44: #{tpu_custom_call.1} parent=1 // pred_region
      %s680 = ssub.s32 2048, 2048
      %681 = vsyncadd [#allocation5], %s680
      %s682 = sshll.u32 [#allocation9], 4
      %s683 = int_to_ptr.vmem [resolvable:$true] %s682
      %688 = dma.vmem_to_hbm [thread:$0]  %s683, 2048, %s5, [#allocation5], 128, 128, 8
    $region45: #{tpu_custom_call.1} parent=1 // pred_fallthru
      _
    // Predicated region
    $region46: #{tpu_custom_call.1} parent=1 // pred_check
      _
    $region47: #{tpu_custom_call.1} parent=1 // pred_check_branch
      %690 = sbr.rel (0) target = $region49
    $region48: #{tpu_custom_call.1} parent=1 // pred_region
      %691 = dma.done [#allocation5], 2048
    $region49: #{tpu_custom_call.1} parent=1 // pred_fallthru
      _
    %692 = vsyncpa [#allocation4], 1
    %693 = vsyncpa [#allocation7], 1
    %694 = vsyncpa [#allocation5], 1

</llo_original>
